<compile_context>
chip_gen: v7x
topology: tpu7x:2x2x1
jax: 0.10.0
libtpu: 0.0.40
codegen_flags: <defaults>
</compile_context>

<pallas_src>
import functools

import jax
import jax.numpy as jnp
from jax.experimental import pallas as pl
from jax.experimental.pallas import tpu as pltpu

_LANE = 128


def _round_up(x, m):
    return ((x + m - 1) // m) * m


def _sublane_multiple(itemsize):
    # f32 -> 8 sublanes, bf16/f16 -> 16, int8/fp8 -> 32.
    return max(8, 32 // int(itemsize))


def _padded_tile_bytes(rows, cols, itemsize):
    """VMEM footprint of one (rows, cols) plane after (sublane, lane) tiling."""
    sub = _sublane_multiple(itemsize)
    return _round_up(rows, sub) * _round_up(cols, _LANE) * int(itemsize)


def _tpu_vmem_and_cores():
    """(physical VMEM bytes per core, TensorCores per chip), with safe fallbacks."""
    vmem_bytes = 64 * 1024 * 1024        # conservative default (v7x per-TC)
    num_cores = 1
    try:
        info = pltpu.get_tpu_info()
        vmem_bytes = int(getattr(info, "vmem_capacity_bytes", vmem_bytes))
        for name in ("num_cores", "core_count", "num_tensorcores",
                     "tensorcores_per_chip"):
            val = getattr(info, name, None)
            if val:
                num_cores = int(val)
                break
    except Exception:
        pass
    return vmem_bytes, num_cores


def _circ_pad_kernel(x_ref, o_ref, *, padding):
    """x_ref: (TB, H, W) block; o_ref: (TB, H + 2p, W + 2p) block."""
    p = padding
    x = x_ref[...]                                                   # (TB, H, W)
    # Wrap along W (lane axis): [ last p cols | x | first p cols ].
    xw = jnp.concatenate([x[:, :, -p:], x, x[:, :, :p]], axis=-1)    # (TB, H, Wp)
    # Wrap along H (sublane axis): [ last p rows | xw | first p rows ].
    out = jnp.concatenate([xw[:, -p:, :], xw, xw[:, :p, :]], axis=-2)  # (TB, Hp, Wp)
    # Single aligned, lane-dense full-tile store.
    o_ref[...] = out


def _circular_pad_xla(x, p):
    """Pure-XLA wrap padding (mirrors the torch module exactly)."""
    upper = x[..., -p:, :]
    lower = x[..., :p, :]
    tmp = jnp.concatenate([upper, x, lower], axis=2)
    left = tmp[..., -p:]
    right = tmp[..., :p]
    return jnp.concatenate([left, tmp, right], axis=3)


def circular_padding_chw(x, padding):
    """x: (N, C, H, W) -> (N, C, H + 2*padding, W + 2*padding), circular wrap."""
    N, C, H, W = x.shape
    p = int(padding)

    if p == 0:
        # Identity by definition; -0 slicing inside the kernel would be wrong.
        return x
    if p > H or p > W:
        raise ValueError(
            f"circular padding wraps at most once: padding={p} > H={H} or W={W}")

    # Lane-sparse planes: Pallas tiles would be heavily lane-masked and VMEM
    # inflated, so the plain XLA wrap-pad path is strictly better.
    if W < _LANE:
        return _circular_pad_xla(x, p)

    Hp, Wp = H + 2 * p, W + 2 * p
    NC = N * C
    x_flat = x.reshape(NC, H, W)

    itemsize = jnp.dtype(x.dtype).itemsize
    vmem_bytes, num_cores = _tpu_vmem_and_cores()
    if vmem_bytes >= 128 * 1024 * 1024:        # v5e / v6e: 128 MiB VMEM.
        vmem_budget = 72 * 1024 * 1024
        vmem_limit = 96 * 1024 * 1024
    else:                                      # v7x (64 MiB per TC) or unknown.
        vmem_budget = 24 * 1024 * 1024
        vmem_limit = 32 * 1024 * 1024

    # Layout-padded per-plane VMEM footprint:
    #   2x double-buffered input block + 2x double-buffered output block
    #   + in-kernel temporaries (the W-wrapped band and the assembled tile).
    in_pb = _padded_tile_bytes(H, W, itemsize)
    out_pb = _padded_tile_bytes(Hp, Wp, itemsize)
    xw_pb = _padded_tile_bytes(H, Wp, itemsize)
    per_plane_bytes = 2 * in_pb + 2 * out_pb + xw_pb + out_pb

    tb = max(1, vmem_budget // per_plane_bytes)
    tb = min(tb, NC)
    if num_cores > 1 and NC >= num_cores:
        # Round the grid to a multiple of the core count with near-equal block
        # sizes so dimension_semantics=("parallel",) load-balances the cores.
        steps = _round_up(pl.cdiv(NC, tb), num_cores)
        tb = pl.cdiv(NC, steps)

    grid = (pl.cdiv(NC, tb),)

    out_flat = pl.pallas_call(
        functools.partial(_circ_pad_kernel, padding=p),
        out_shape=jax.ShapeDtypeStruct((NC, Hp, Wp), x.dtype),
        grid_spec=pltpu.PrefetchScalarGridSpec(
            num_scalar_prefetch=0,
            grid=grid,
            in_specs=[pl.BlockSpec((tb, H, W), lambda i: (i, 0, 0))],
            out_specs=pl.BlockSpec((tb, Hp, Wp), lambda i: (i, 0, 0)),
        ),
        compiler_params=pltpu.CompilerParams(
            dimension_semantics=("parallel",),
            vmem_limit_bytes=vmem_limit,
        ),
        cost_estimate=pl.CostEstimate(
            flops=0,
            transcendentals=0,
            bytes_accessed=int(NC * (H * W + Hp * Wp) * itemsize),
        ),
    )(x_flat)

    return out_flat.reshape(N, C, Hp, Wp)


if __name__ == "__main__":
    key = jax.random.PRNGKey(0)
    p = 2

    def _ref(x, pad):
        return jnp.pad(x, ((0, 0), (0, 0), (pad, pad), (pad, pad)), mode="wrap")

    # Small, module-consistent shape (W < 128 -> lane-sparse, XLA wrap-pad path).
    x_small = jax.random.normal(key, (2, 4, 16, 16), dtype=jnp.float32)
    out_small = jax.block_until_ready(circular_padding_chw(x_small, p))
    assert out_small.shape == (2, 4, 20, 20), out_small.shape
    assert jnp.allclose(out_small, _ref(x_small, p)), "small-shape mismatch"

    # Lane-dense shape (W >= 128) exercises the Pallas kernel path.
    x_big = jax.random.normal(key, (2, 4, 128, 128), dtype=jnp.float32)
    out_big = jax.block_until_ready(circular_padding_chw(x_big, p))
    assert out_big.shape == (2, 4, 132, 132), out_big.shape
    assert jnp.allclose(out_big, _ref(x_big, p)), "Pallas-path mismatch"

    # padding == 0 stays the identity.
    out0 = jax.block_until_ready(circular_padding_chw(x_small, 0))
    assert jnp.array_equal(out0, x_small)

    print("KERNEL_OK")
</pallas_src>

<mosaic_0001>
module attributes {stable_mosaic.version = 11 : i64} {
  func.func @_circ_pad_kernel(%arg0: i32, %arg1: memref<8x128x128xf32, #tpu.memory_space<vmem>>, %arg2: memref<8x132x132xf32, #tpu.memory_space<vmem>>) attributes {dimension_semantics = [#tpu.dimension_semantics<parallel>], iteration_bounds = array<i64: 1>, scalar_prefetch = 0 : i64, scratch_operands = 0 : i64, tpu.core_type = #tpu.core_type<tc>, window_params = [{transform_indices = @transform_0, window_bounds = array<i64: 8, 128, 128>}, {transform_indices = @transform_1, window_bounds = array<i64: 8, 132, 132>}]} {
    %c0 = arith.constant 0 : index
    %c0_0 = arith.constant 0 : index
    %c0_1 = arith.constant 0 : index
    %0 = vector.load %arg1[%c0, %c0_0, %c0_1] : memref<8x128x128xf32, #tpu.memory_space<vmem>>, vector<8x128x128xf32>
    %1 = vector.extract_strided_slice %0 {offsets = [0, 0, 126], sizes = [8, 128, 2], strides = [1, 1, 1]} : vector<8x128x128xf32> to vector<8x128x2xf32>
    %2 = vector.extract_strided_slice %0 {offsets = [0, 0, 0], sizes = [8, 128, 2], strides = [1, 1, 1]} : vector<8x128x128xf32> to vector<8x128x2xf32>
    %3 = tpu.concatenate %1, %0, %2 in 2 : vector<8x128x2xf32>, vector<8x128x128xf32>, vector<8x128x2xf32> -> vector<8x128x132xf32>
    %4 = vector.extract_strided_slice %3 {offsets = [0, 126, 0], sizes = [8, 2, 132], strides = [1, 1, 1]} : vector<8x128x132xf32> to vector<8x2x132xf32>
    %5 = vector.extract_strided_slice %3 {offsets = [0, 0, 0], sizes = [8, 2, 132], strides = [1, 1, 1]} : vector<8x128x132xf32> to vector<8x2x132xf32>
    %6 = tpu.concatenate %4, %3, %5 in 1 : vector<8x2x132xf32>, vector<8x128x132xf32>, vector<8x2x132xf32> -> vector<8x132x132xf32>
    %c0_2 = arith.constant 0 : index
    %c0_3 = arith.constant 0 : index
    %c0_4 = arith.constant 0 : index
    %7 = vector.load %arg2[%c0_2, %c0_3, %c0_4] : memref<8x132x132xf32, #tpu.memory_space<vmem>>, vector<8x132x132xf32>
    tpu.vector_store %arg2[%c0_2, %c0_3, %c0_4], %6 {strides = array<i32>} : memref<8x132x132xf32, #tpu.memory_space<vmem>>, vector<8x132x132xf32>,
    return
  }
  func.func @transform_0(%arg0: i32) -> (i32, i32, i32) {
    %c0_i32 = arith.constant 0 : i32
    %c0_i32_0 = arith.constant 0 : i32
    %c0_i32_1 = arith.constant 0 : i32
    return %arg0, %c0_i32, %c0_i32_0 : i32, i32, i32
  }
  func.func @transform_1(%arg0: i32) -> (i32, i32, i32) {
    %c0_i32 = arith.constant 0 : i32
    %c0_i32_0 = arith.constant 0 : i32
    %c0_i32_1 = arith.constant 0 : i32
    return %arg0, %c0_i32, %c0_i32_0 : i32, i32, i32
  }
}

</mosaic_0001>

<llo_original>
// kernel: tpu_custom_call.1
$region0: #{tpu_custom_call.1}
  #allocation0 [shape = 'u32[]', space=smem, size = 0x4, offset = 0x4, fixed_abs, tag = 'smem constant byte address 0x4 - core index']
  #allocation1 [shape = 'u32[144,128]{1,0:T(1,128)}', space=vmem, size = 0x12000, scoped, tag = 'internal scratch']
  %s0 = inlined_call_operand.hbm [shape: f32[8,128,128], index: 0, kind: input, shape index: {}]
  %s1 = inlined_call_operand.vmem [shape: f32[8,132,132], index: 1, kind: output, shape index: {}]
  %s2 = sld [smem:[#allocation0]]
  $region18: #{tpu_custom_call.1} parent=0
    _
  %s4 = ssub.s32 1, %s2
  %s5 = scalar_select 0, %s4, %s2
  $region1: #{tpu_custom_call.1} parent=0
    #allocation2 [shape = 'u8[524288]{0}', space=vmem, size = 0x80000, scoped, tag = 'input window, operand 0, single buffered']
    #allocation3 [shape = 's32[1]{0}', space=sflag, size = 0x4, scoped, tag = 'scoped memory for tpu_custom_call.1']
    %6 = vsyncpa [#allocation3], 0
    // Predicated region
    $region2: #{tpu_custom_call.1} parent=1 // pred_check
      _
    $region3: #{tpu_custom_call.1} parent=1 // pred_check_branch
      %8 = sbr.rel (0) target = $region5
    $region4: #{tpu_custom_call.1} parent=1 // pred_region
      %s10 = ssub.s32 16384, 16384
      %11 = vsyncadd [#allocation3], %s10
      %s12 = sshll.u32 [#allocation2], 4
      %s13 = int_to_ptr.vmem [resolvable:$true] %s12
      %18 = dma.hbm_to_vmem [thread:$0]  %s0, 16384, %s13, [#allocation3], 128, 128, 8
    $region5: #{tpu_custom_call.1} parent=1 // pred_fallthru
      _
    // Predicated region
    $region6: #{tpu_custom_call.1} parent=1 // pred_check
      _
    $region7: #{tpu_custom_call.1} parent=1 // pred_check_branch
      %20 = sbr.rel (0) target = $region9
    $region8: #{tpu_custom_call.1} parent=1 // pred_region
      %21 = dma.done [#allocation3], 16384
    $region9: #{tpu_custom_call.1} parent=1 // pred_fallthru
      _
    %v22 = vld [vmem:[#allocation2] sm:$0xff]
    %v23 = vld [vmem:[#allocation2 + $0x8] sm:$0xff]
    %v24 = vld [vmem:[#allocation2 + $0x10] sm:$0xff]
    %v25 = vld [vmem:[#allocation2 + $0x18] sm:$0xff]
    %v26 = vld [vmem:[#allocation2 + $0x20] sm:$0xff]
    %v27 = vld [vmem:[#allocation2 + $0x28] sm:$0xff]
    %v28 = vld [vmem:[#allocation2 + $0x30] sm:$0xff]
    %v29 = vld [vmem:[#allocation2 + $0x38] sm:$0xff]
    %v30 = vld [vmem:[#allocation2 + $0x40] sm:$0xff]
    %v31 = vld [vmem:[#allocation2 + $0x48] sm:$0xff]
    %v32 = vld [vmem:[#allocation2 + $0x50] sm:$0xff]
    %v33 = vld [vmem:[#allocation2 + $0x58] sm:$0xff]
    %v34 = vld [vmem:[#allocation2 + $0x60] sm:$0xff]
    %v35 = vld [vmem:[#allocation2 + $0x68] sm:$0xff]
    %v36 = vld [vmem:[#allocation2 + $0x70] sm:$0xff]
    %v37 = vld [vmem:[#allocation2 + $0x78] sm:$0xff]
    %v38 = vld [vmem:[#allocation2 + $0x80] sm:$0xff]
    %v39 = vld [vmem:[#allocation2 + $0x88] sm:$0xff]
    %v40 = vld [vmem:[#allocation2 + $0x90] sm:$0xff]
    %v41 = vld [vmem:[#allocation2 + $0x98] sm:$0xff]
    %v42 = vld [vmem:[#allocation2 + $0xa0] sm:$0xff]
    %v43 = vld [vmem:[#allocation2 + $0xa8] sm:$0xff]
    %v44 = vld [vmem:[#allocation2 + $0xb0] sm:$0xff]
    %v45 = vld [vmem:[#allocation2 + $0xb8] sm:$0xff]
    %v46 = vld [vmem:[#allocation2 + $0xc0] sm:$0xff]
    %v47 = vld [vmem:[#allocation2 + $0xc8] sm:$0xff]
    %v48 = vld [vmem:[#allocation2 + $0xd0] sm:$0xff]
    %v49 = vld [vmem:[#allocation2 + $0xd8] sm:$0xff]
    %v50 = vld [vmem:[#allocation2 + $0xe0] sm:$0xff]
    %v51 = vld [vmem:[#allocation2 + $0xe8] sm:$0xff]
    %v52 = vld [vmem:[#allocation2 + $0xf0] sm:$0xff]
    %v53 = vld [vmem:[#allocation2 + $0xf8] sm:$0xff]
    %v54 = vld [vmem:[#allocation2 + $0x100] sm:$0xff]
    %v55 = vld [vmem:[#allocation2 + $0x108] sm:$0xff]
    %v56 = vld [vmem:[#allocation2 + $0x110] sm:$0xff]
    %v57 = vld [vmem:[#allocation2 + $0x118] sm:$0xff]
    %v58 = vld [vmem:[#allocation2 + $0x120] sm:$0xff]
    %v59 = vld [vmem:[#allocation2 + $0x128] sm:$0xff]
    %v60 = vld [vmem:[#allocation2 + $0x130] sm:$0xff]
    %v61 = vld [vmem:[#allocation2 + $0x138] sm:$0xff]
    %v62 = vld [vmem:[#allocation2 + $0x140] sm:$0xff]
    %v63 = vld [vmem:[#allocation2 + $0x148] sm:$0xff]
    %v64 = vld [vmem:[#allocation2 + $0x150] sm:$0xff]
    %v65 = vld [vmem:[#allocation2 + $0x158] sm:$0xff]
    %v66 = vld [vmem:[#allocation2 + $0x160] sm:$0xff]
    %v67 = vld [vmem:[#allocation2 + $0x168] sm:$0xff]
    %v68 = vld [vmem:[#allocation2 + $0x170] sm:$0xff]
    %v69 = vld [vmem:[#allocation2 + $0x178] sm:$0xff]
    %v70 = vld [vmem:[#allocation2 + $0x180] sm:$0xff]
    %v71 = vld [vmem:[#allocation2 + $0x188] sm:$0xff]
    %v72 = vld [vmem:[#allocation2 + $0x190] sm:$0xff]
    %v73 = vld [vmem:[#allocation2 + $0x198] sm:$0xff]
    %v74 = vld [vmem:[#allocation2 + $0x1a0] sm:$0xff]
    %v75 = vld [vmem:[#allocation2 + $0x1a8] sm:$0xff]
    %v76 = vld [vmem:[#allocation2 + $0x1b0] sm:$0xff]
    %v77 = vld [vmem:[#allocation2 + $0x1b8] sm:$0xff]
    %v78 = vld [vmem:[#allocation2 + $0x1c0] sm:$0xff]
    %v79 = vld [vmem:[#allocation2 + $0x1c8] sm:$0xff]
    %v80 = vld [vmem:[#allocation2 + $0x1d0] sm:$0xff]
    %v81 = vld [vmem:[#allocation2 + $0x1d8] sm:$0xff]
    %v82 = vld [vmem:[#allocation2 + $0x1e0] sm:$0xff]
    %v83 = vld [vmem:[#allocation2 + $0x1e8] sm:$0xff]
    %v84 = vld [vmem:[#allocation2 + $0x1f0] sm:$0xff]
    %v85 = vld [vmem:[#allocation2 + $0x1f8] sm:$0xff]
    %v86 = vld [vmem:[#allocation2 + $0x200] sm:$0xff]
    %v87 = vld [vmem:[#allocation2 + $0x208] sm:$0xff]
    %v88 = vld [vmem:[#allocation2 + $0x210] sm:$0xff]
    %v89 = vld [vmem:[#allocation2 + $0x218] sm:$0xff]
    %v90 = vld [vmem:[#allocation2 + $0x220] sm:$0xff]
    %v91 = vld [vmem:[#allocation2 + $0x228] sm:$0xff]
    %v92 = vld [vmem:[#allocation2 + $0x230] sm:$0xff]
    %v93 = vld [vmem:[#allocation2 + $0x238] sm:$0xff]
    %v94 = vld [vmem:[#allocation2 + $0x240] sm:$0xff]
    %v95 = vld [vmem:[#allocation2 + $0x248] sm:$0xff]
    %v96 = vld [vmem:[#allocation2 + $0x250] sm:$0xff]
    %v97 = vld [vmem:[#allocation2 + $0x258] sm:$0xff]
    %v98 = vld [vmem:[#allocation2 + $0x260] sm:$0xff]
    %v99 = vld [vmem:[#allocation2 + $0x268] sm:$0xff]
    %v100 = vld [vmem:[#allocation2 + $0x270] sm:$0xff]
    %v101 = vld [vmem:[#allocation2 + $0x278] sm:$0xff]
    %v102 = vld [vmem:[#allocation2 + $0x280] sm:$0xff]
    %v103 = vld [vmem:[#allocation2 + $0x288] sm:$0xff]
    %v104 = vld [vmem:[#allocation2 + $0x290] sm:$0xff]
    %v105 = vld [vmem:[#allocation2 + $0x298] sm:$0xff]
    %v106 = vld [vmem:[#allocation2 + $0x2a0] sm:$0xff]
    %v107 = vld [vmem:[#allocation2 + $0x2a8] sm:$0xff]
    %v108 = vld [vmem:[#allocation2 + $0x2b0] sm:$0xff]
    %v109 = vld [vmem:[#allocation2 + $0x2b8] sm:$0xff]
    %v110 = vld [vmem:[#allocation2 + $0x2c0] sm:$0xff]
    %v111 = vld [vmem:[#allocation2 + $0x2c8] sm:$0xff]
    %v112 = vld [vmem:[#allocation2 + $0x2d0] sm:$0xff]
    %v113 = vld [vmem:[#allocation2 + $0x2d8] sm:$0xff]
    %v114 = vld [vmem:[#allocation2 + $0x2e0] sm:$0xff]
    %v115 = vld [vmem:[#allocation2 + $0x2e8] sm:$0xff]
    %v116 = vld [vmem:[#allocation2 + $0x2f0] sm:$0xff]
    %v117 = vld [vmem:[#allocation2 + $0x2f8] sm:$0xff]
    %v118 = vld [vmem:[#allocation2 + $0x300] sm:$0xff]
    %v119 = vld [vmem:[#allocation2 + $0x308] sm:$0xff]
    %v120 = vld [vmem:[#allocation2 + $0x310] sm:$0xff]
    %v121 = vld [vmem:[#allocation2 + $0x318] sm:$0xff]
    %v122 = vld [vmem:[#allocation2 + $0x320] sm:$0xff]
    %v123 = vld [vmem:[#allocation2 + $0x328] sm:$0xff]
    %v124 = vld [vmem:[#allocation2 + $0x330] sm:$0xff]
    %v125 = vld [vmem:[#allocation2 + $0x338] sm:$0xff]
    %v126 = vld [vmem:[#allocation2 + $0x340] sm:$0xff]
    %v127 = vld [vmem:[#allocation2 + $0x348] sm:$0xff]
    %v128 = vld [vmem:[#allocation2 + $0x350] sm:$0xff]
    %v129 = vld [vmem:[#allocation2 + $0x358] sm:$0xff]
    %v130 = vld [vmem:[#allocation2 + $0x360] sm:$0xff]
    %v131 = vld [vmem:[#allocation2 + $0x368] sm:$0xff]
    %v132 = vld [vmem:[#allocation2 + $0x370] sm:$0xff]
    %v133 = vld [vmem:[#allocation2 + $0x378] sm:$0xff]
    %v134 = vld [vmem:[#allocation2 + $0x380] sm:$0xff]
    %v135 = vld [vmem:[#allocation2 + $0x388] sm:$0xff]
    %v136 = vld [vmem:[#allocation2 + $0x390] sm:$0xff]
    %v137 = vld [vmem:[#allocation2 + $0x398] sm:$0xff]
    %v138 = vld [vmem:[#allocation2 + $0x3a0] sm:$0xff]
    %v139 = vld [vmem:[#allocation2 + $0x3a8] sm:$0xff]
    %v140 = vld [vmem:[#allocation2 + $0x3b0] sm:$0xff]
    %v141 = vld [vmem:[#allocation2 + $0x3b8] sm:$0xff]
    %v142 = vld [vmem:[#allocation2 + $0x3c0] sm:$0xff]
    %v143 = vld [vmem:[#allocation2 + $0x3c8] sm:$0xff]
    %v144 = vld [vmem:[#allocation2 + $0x3d0] sm:$0xff]
    %v145 = vld [vmem:[#allocation2 + $0x3d8] sm:$0xff]
    %v146 = vld [vmem:[#allocation2 + $0x3e0] sm:$0xff]
    %v147 = vld [vmem:[#allocation2 + $0x3e8] sm:$0xff]
    %v148 = vld [vmem:[#allocation2 + $0x3f0] sm:$0xff]
    %v149 = vld [vmem:[#allocation2 + $0x3f8] sm:$0xff]
    %278 = vrot.lane.b32.xlu0 %v22, 2
    %v279 = vpop.permute.xlu0 %278
    %280 = vrot.lane.b32.xlu0 %v23, 2
    %v281 = vpop.permute.xlu0 %280
    %282 = vrot.lane.b32.xlu0 %v24, 2
    %v283 = vpop.permute.xlu0 %282
    %284 = vrot.lane.b32.xlu0 %v25, 2
    %v285 = vpop.permute.xlu0 %284
    %286 = vrot.lane.b32.xlu0 %v26, 2
    %v287 = vpop.permute.xlu0 %286
    %288 = vrot.lane.b32.xlu0 %v27, 2
    %v289 = vpop.permute.xlu0 %288
    %290 = vrot.lane.b32.xlu0 %v28, 2
    %v291 = vpop.permute.xlu0 %290
    %292 = vrot.lane.b32.xlu0 %v29, 2
    %v293 = vpop.permute.xlu0 %292
    %294 = vrot.lane.b32.xlu0 %v30, 2
    %v295 = vpop.permute.xlu0 %294
    %296 = vrot.lane.b32.xlu0 %v31, 2
    %v297 = vpop.permute.xlu0 %296
    %298 = vrot.lane.b32.xlu0 %v32, 2
    %v299 = vpop.permute.xlu0 %298
    %300 = vrot.lane.b32.xlu0 %v33, 2
    %v301 = vpop.permute.xlu0 %300
    %302 = vrot.lane.b32.xlu0 %v34, 2
    %v303 = vpop.permute.xlu0 %302
    %304 = vrot.lane.b32.xlu0 %v35, 2
    %v305 = vpop.permute.xlu0 %304
    %306 = vrot.lane.b32.xlu0 %v36, 2
    %v307 = vpop.permute.xlu0 %306
    %308 = vrot.lane.b32.xlu0 %v37, 2
    %v309 = vpop.permute.xlu0 %308
    %310 = vrot.lane.b32.xlu0 %v38, 2
    %v311 = vpop.permute.xlu0 %310
    %312 = vrot.lane.b32.xlu0 %v39, 2
    %v313 = vpop.permute.xlu0 %312
    %314 = vrot.lane.b32.xlu0 %v40, 2
    %v315 = vpop.permute.xlu0 %314
    %316 = vrot.lane.b32.xlu0 %v41, 2
    %v317 = vpop.permute.xlu0 %316
    %318 = vrot.lane.b32.xlu0 %v42, 2
    %v319 = vpop.permute.xlu0 %318
    %320 = vrot.lane.b32.xlu0 %v43, 2
    %v321 = vpop.permute.xlu0 %320
    %322 = vrot.lane.b32.xlu0 %v44, 2
    %v323 = vpop.permute.xlu0 %322
    %324 = vrot.lane.b32.xlu0 %v45, 2
    %v325 = vpop.permute.xlu0 %324
    %326 = vrot.lane.b32.xlu0 %v46, 2
    %v327 = vpop.permute.xlu0 %326
    %328 = vrot.lane.b32.xlu0 %v47, 2
    %v329 = vpop.permute.xlu0 %328
    %330 = vrot.lane.b32.xlu0 %v48, 2
    %v331 = vpop.permute.xlu0 %330
    %332 = vrot.lane.b32.xlu0 %v49, 2
    %v333 = vpop.permute.xlu0 %332
    %334 = vrot.lane.b32.xlu0 %v50, 2
    %v335 = vpop.permute.xlu0 %334
    %336 = vrot.lane.b32.xlu0 %v51, 2
    %v337 = vpop.permute.xlu0 %336
    %338 = vrot.lane.b32.xlu0 %v52, 2
    %v339 = vpop.permute.xlu0 %338
    %340 = vrot.lane.b32.xlu0 %v53, 2
    %v341 = vpop.permute.xlu0 %340
    %342 = vrot.lane.b32.xlu0 %v54, 2
    %v343 = vpop.permute.xlu0 %342
    %344 = vrot.lane.b32.xlu0 %v55, 2
    %v345 = vpop.permute.xlu0 %344
    %346 = vrot.lane.b32.xlu0 %v56, 2
    %v347 = vpop.permute.xlu0 %346
    %348 = vrot.lane.b32.xlu0 %v57, 2
    %v349 = vpop.permute.xlu0 %348
    %350 = vrot.lane.b32.xlu0 %v58, 2
    %v351 = vpop.permute.xlu0 %350
    %352 = vrot.lane.b32.xlu0 %v59, 2
    %v353 = vpop.permute.xlu0 %352
    %354 = vrot.lane.b32.xlu0 %v60, 2
    %v355 = vpop.permute.xlu0 %354
    %356 = vrot.lane.b32.xlu0 %v61, 2
    %v357 = vpop.permute.xlu0 %356
    %358 = vrot.lane.b32.xlu0 %v62, 2
    %v359 = vpop.permute.xlu0 %358
    %360 = vrot.lane.b32.xlu0 %v63, 2
    %v361 = vpop.permute.xlu0 %360
    %362 = vrot.lane.b32.xlu0 %v64, 2
    %v363 = vpop.permute.xlu0 %362
    %364 = vrot.lane.b32.xlu0 %v65, 2
    %v365 = vpop.permute.xlu0 %364
    %366 = vrot.lane.b32.xlu0 %v66, 2
    %v367 = vpop.permute.xlu0 %366
    %368 = vrot.lane.b32.xlu0 %v67, 2
    %v369 = vpop.permute.xlu0 %368
    %370 = vrot.lane.b32.xlu0 %v68, 2
    %v371 = vpop.permute.xlu0 %370
    %372 = vrot.lane.b32.xlu0 %v69, 2
    %v373 = vpop.permute.xlu0 %372
    %374 = vrot.lane.b32.xlu0 %v70, 2
    %v375 = vpop.permute.xlu0 %374
    %376 = vrot.lane.b32.xlu0 %v71, 2
    %v377 = vpop.permute.xlu0 %376
    %378 = vrot.lane.b32.xlu0 %v72, 2
    %v379 = vpop.permute.xlu0 %378
    %380 = vrot.lane.b32.xlu0 %v73, 2
    %v381 = vpop.permute.xlu0 %380
    %382 = vrot.lane.b32.xlu0 %v74, 2
    %v383 = vpop.permute.xlu0 %382
    %384 = vrot.lane.b32.xlu0 %v75, 2
    %v385 = vpop.permute.xlu0 %384
    %386 = vrot.lane.b32.xlu0 %v76, 2
    %v387 = vpop.permute.xlu0 %386
    %388 = vrot.lane.b32.xlu0 %v77, 2
    %v389 = vpop.permute.xlu0 %388
    %390 = vrot.lane.b32.xlu0 %v78, 2
    %v391 = vpop.permute.xlu0 %390
    %392 = vrot.lane.b32.xlu0 %v79, 2
    %v393 = vpop.permute.xlu0 %392
    %394 = vrot.lane.b32.xlu0 %v80, 2
    %v395 = vpop.permute.xlu0 %394
    %396 = vrot.lane.b32.xlu0 %v81, 2
    %v397 = vpop.permute.xlu0 %396
    %398 = vrot.lane.b32.xlu0 %v82, 2
    %v399 = vpop.permute.xlu0 %398
    %400 = vrot.lane.b32.xlu0 %v83, 2
    %v401 = vpop.permute.xlu0 %400
    %402 = vrot.lane.b32.xlu0 %v84, 2
    %v403 = vpop.permute.xlu0 %402
    %404 = vrot.lane.b32.xlu0 %v85, 2
    %v405 = vpop.permute.xlu0 %404
    %406 = vrot.lane.b32.xlu0 %v86, 2
    %v407 = vpop.permute.xlu0 %406
    %408 = vrot.lane.b32.xlu0 %v87, 2
    %v409 = vpop.permute.xlu0 %408
    %410 = vrot.lane.b32.xlu0 %v88, 2
    %v411 = vpop.permute.xlu0 %410
    %412 = vrot.lane.b32.xlu0 %v89, 2
    %v413 = vpop.permute.xlu0 %412
    %414 = vrot.lane.b32.xlu0 %v90, 2
    %v415 = vpop.permute.xlu0 %414
    %416 = vrot.lane.b32.xlu0 %v91, 2
    %v417 = vpop.permute.xlu0 %416
    %418 = vrot.lane.b32.xlu0 %v92, 2
    %v419 = vpop.permute.xlu0 %418
    %420 = vrot.lane.b32.xlu0 %v93, 2
    %v421 = vpop.permute.xlu0 %420
    %422 = vrot.lane.b32.xlu0 %v94, 2
    %v423 = vpop.permute.xlu0 %422
    %424 = vrot.lane.b32.xlu0 %v95, 2
    %v425 = vpop.permute.xlu0 %424
    %426 = vrot.lane.b32.xlu0 %v96, 2
    %v427 = vpop.permute.xlu0 %426
    %428 = vrot.lane.b32.xlu0 %v97, 2
    %v429 = vpop.permute.xlu0 %428
    %430 = vrot.lane.b32.xlu0 %v98, 2
    %v431 = vpop.permute.xlu0 %430
    %432 = vrot.lane.b32.xlu0 %v99, 2
    %v433 = vpop.permute.xlu0 %432
    %434 = vrot.lane.b32.xlu0 %v100, 2
    %v435 = vpop.permute.xlu0 %434
    %436 = vrot.lane.b32.xlu0 %v101, 2
    %v437 = vpop.permute.xlu0 %436
    %438 = vrot.lane.b32.xlu0 %v102, 2
    %v439 = vpop.permute.xlu0 %438
    %440 = vrot.lane.b32.xlu0 %v103, 2
    %v441 = vpop.permute.xlu0 %440
    %442 = vrot.lane.b32.xlu0 %v104, 2
    %v443 = vpop.permute.xlu0 %442
    %444 = vrot.lane.b32.xlu0 %v105, 2
    %v445 = vpop.permute.xlu0 %444
    %446 = vrot.lane.b32.xlu0 %v106, 2
    %v447 = vpop.permute.xlu0 %446
    %448 = vrot.lane.b32.xlu0 %v107, 2
    %v449 = vpop.permute.xlu0 %448
    %450 = vrot.lane.b32.xlu0 %v108, 2
    %v451 = vpop.permute.xlu0 %450
    %452 = vrot.lane.b32.xlu0 %v109, 2
    %v453 = vpop.permute.xlu0 %452
    %454 = vrot.lane.b32.xlu0 %v110, 2
    %v455 = vpop.permute.xlu0 %454
    %456 = vrot.lane.b32.xlu0 %v111, 2
    %v457 = vpop.permute.xlu0 %456
    %458 = vrot.lane.b32.xlu0 %v112, 2
    %v459 = vpop.permute.xlu0 %458
    %460 = vrot.lane.b32.xlu0 %v113, 2
    %v461 = vpop.permute.xlu0 %460
    %462 = vrot.lane.b32.xlu0 %v114, 2
    %v463 = vpop.permute.xlu0 %462
    %464 = vrot.lane.b32.xlu0 %v115, 2
    %v465 = vpop.permute.xlu0 %464
    %466 = vrot.lane.b32.xlu0 %v116, 2
    %v467 = vpop.permute.xlu0 %466
    %468 = vrot.lane.b32.xlu0 %v117, 2
    %v469 = vpop.permute.xlu0 %468
    %470 = vrot.lane.b32.xlu0 %v118, 2
    %v471 = vpop.permute.xlu0 %470
    %472 = vrot.lane.b32.xlu0 %v119, 2
    %v473 = vpop.permute.xlu0 %472
    %474 = vrot.lane.b32.xlu0 %v120, 2
    %v475 = vpop.permute.xlu0 %474
    %476 = vrot.lane.b32.xlu0 %v121, 2
    %v477 = vpop.permute.xlu0 %476
    %478 = vrot.lane.b32.xlu0 %v122, 2
    %v479 = vpop.permute.xlu0 %478
    %480 = vrot.lane.b32.xlu0 %v123, 2
    %v481 = vpop.permute.xlu0 %480
    %482 = vrot.lane.b32.xlu0 %v124, 2
    %v483 = vpop.permute.xlu0 %482
    %484 = vrot.lane.b32.xlu0 %v125, 2
    %v485 = vpop.permute.xlu0 %484
    %486 = vrot.lane.b32.xlu0 %v126, 2
    %v487 = vpop.permute.xlu0 %486
    %488 = vrot.lane.b32.xlu0 %v127, 2
    %v489 = vpop.permute.xlu0 %488
    %490 = vrot.lane.b32.xlu0 %v128, 2
    %v491 = vpop.permute.xlu0 %490
    %492 = vrot.lane.b32.xlu0 %v129, 2
    %v493 = vpop.permute.xlu0 %492
    %494 = vrot.lane.b32.xlu0 %v130, 2
    %v495 = vpop.permute.xlu0 %494
    %496 = vrot.lane.b32.xlu0 %v131, 2
    %v497 = vpop.permute.xlu0 %496
    %498 = vrot.lane.b32.xlu0 %v132, 2
    %v499 = vpop.permute.xlu0 %498
    %500 = vrot.lane.b32.xlu0 %v133, 2
    %v501 = vpop.permute.xlu0 %500
    %502 = vrot.lane.b32.xlu0 %v134, 2
    %v503 = vpop.permute.xlu0 %502
    %504 = vrot.lane.b32.xlu0 %v135, 2
    %v505 = vpop.permute.xlu0 %504
    %506 = vrot.lane.b32.xlu0 %v136, 2
    %v507 = vpop.permute.xlu0 %506
    %508 = vrot.lane.b32.xlu0 %v137, 2
    %v509 = vpop.permute.xlu0 %508
    %510 = vrot.lane.b32.xlu0 %v138, 2
    %v511 = vpop.permute.xlu0 %510
    %512 = vrot.lane.b32.xlu0 %v139, 2
    %v513 = vpop.permute.xlu0 %512
    %514 = vrot.lane.b32.xlu0 %v140, 2
    %v515 = vpop.permute.xlu0 %514
    %516 = vrot.lane.b32.xlu0 %v141, 2
    %v517 = vpop.permute.xlu0 %516
    %518 = vrot.lane.b32.xlu0 %v142, 2
    %v519 = vpop.permute.xlu0 %518
    %520 = vrot.lane.b32.xlu0 %v143, 2
    %v521 = vpop.permute.xlu0 %520
    %522 = vrot.lane.b32.xlu0 %v144, 2
    %v523 = vpop.permute.xlu0 %522
    %524 = vrot.lane.b32.xlu0 %v145, 2
    %v525 = vpop.permute.xlu0 %524
    %526 = vrot.lane.b32.xlu0 %v146, 2
    %v527 = vpop.permute.xlu0 %526
    %528 = vrot.lane.b32.xlu0 %v147, 2
    %v529 = vpop.permute.xlu0 %528
    %530 = vrot.lane.b32.xlu0 %v148, 2
    %v531 = vpop.permute.xlu0 %530
    %532 = vrot.lane.b32.xlu0 %v149, 2
    %v533 = vpop.permute.xlu0 %532
    %v670 = vrot.slane %v309, 6
    %v671 = vrot.slane %v341, 6
    %v672 = vrot.slane %v373, 6
    %v673 = vrot.slane %v405, 6
    %v674 = vrot.slane %v437, 6
    %v675 = vrot.slane %v469, 6
    %v676 = vrot.slane %v501, 6
    %v677 = vrot.slane %v533, 6
    %vm806 = vcmask 1041408
    %v807 = vrot.slane %v279, 6
    %v808 = vrot.slane %v281, 6
    %v809 = vsel %vm806, %v807, %v808
    %v810 = vrot.slane %v283, 6
    %v811 = vsel %vm806, %v808, %v810
    %v812 = vrot.slane %v285, 6
    %v813 = vsel %vm806, %v810, %v812
    %v814 = vrot.slane %v287, 6
    %v815 = vsel %vm806, %v812, %v814
    %v816 = vrot.slane %v289, 6
    %v817 = vsel %vm806, %v814, %v816
    %v818 = vrot.slane %v291, 6
    %v819 = vsel %vm806, %v816, %v818
    %v820 = vrot.slane %v293, 6
    %v821 = vsel %vm806, %v818, %v820
    %v822 = vrot.slane %v295, 6
    %v823 = vsel %vm806, %v820, %v822
    %v824 = vrot.slane %v297, 6
    %v825 = vsel %vm806, %v822, %v824
    %v826 = vrot.slane %v299, 6
    %v827 = vsel %vm806, %v824, %v826
    %v828 = vrot.slane %v301, 6
    %v829 = vsel %vm806, %v826, %v828
    %v830 = vrot.slane %v303, 6
    %v831 = vsel %vm806, %v828, %v830
    %v832 = vrot.slane %v305, 6
    %v833 = vsel %vm806, %v830, %v832
    %v834 = vrot.slane %v307, 6
    %v835 = vsel %vm806, %v832, %v834
    %v836 = vsel %vm806, %v834, %v670
    %v837 = vrot.slane %v311, 6
    %v838 = vrot.slane %v313, 6
    %v839 = vsel %vm806, %v837, %v838
    %v840 = vrot.slane %v315, 6
    %v841 = vsel %vm806, %v838, %v840
    %v842 = vrot.slane %v317, 6
    %v843 = vsel %vm806, %v840, %v842
    %v844 = vrot.slane %v319, 6
    %v845 = vsel %vm806, %v842, %v844
    %v846 = vrot.slane %v321, 6
    %v847 = vsel %vm806, %v844, %v846
    %v848 = vrot.slane %v323, 6
    %v849 = vsel %vm806, %v846, %v848
    %v850 = vrot.slane %v325, 6
    %v851 = vsel %vm806, %v848, %v850
    %v852 = vrot.slane %v327, 6
    %v853 = vsel %vm806, %v850, %v852
    %v854 = vrot.slane %v329, 6
    %v855 = vsel %vm806, %v852, %v854
    %v856 = vrot.slane %v331, 6
    %v857 = vsel %vm806, %v854, %v856
    %v858 = vrot.slane %v333, 6
    %v859 = vsel %vm806, %v856, %v858
    %v860 = vrot.slane %v335, 6
    %v861 = vsel %vm806, %v858, %v860
    %v862 = vrot.slane %v337, 6
    %v863 = vsel %vm806, %v860, %v862
    %v864 = vrot.slane %v339, 6
    %v865 = vsel %vm806, %v862, %v864
    %v866 = vsel %vm806, %v864, %v671
    %v867 = vrot.slane %v343, 6
    %v868 = vrot.slane %v345, 6
    %v869 = vsel %vm806, %v867, %v868
    %v870 = vrot.slane %v347, 6
    %v871 = vsel %vm806, %v868, %v870
    %v872 = vrot.slane %v349, 6
    %v873 = vsel %vm806, %v870, %v872
    %v874 = vrot.slane %v351, 6
    %v875 = vsel %vm806, %v872, %v874
    %v876 = vrot.slane %v353, 6
    %v877 = vsel %vm806, %v874, %v876
    %v878 = vrot.slane %v355, 6
    %v879 = vsel %vm806, %v876, %v878
    %v880 = vrot.slane %v357, 6
    %v881 = vsel %vm806, %v878, %v880
    %v882 = vrot.slane %v359, 6
    %v883 = vsel %vm806, %v880, %v882
    %v884 = vrot.slane %v361, 6
    %v885 = vsel %vm806, %v882, %v884
    %v886 = vrot.slane %v363, 6
    %v887 = vsel %vm806, %v884, %v886
    %v888 = vrot.slane %v365, 6
    %v889 = vsel %vm806, %v886, %v888
    %v890 = vrot.slane %v367, 6
    %v891 = vsel %vm806, %v888, %v890
    %v892 = vrot.slane %v369, 6
    %v893 = vsel %vm806, %v890, %v892
    %v894 = vrot.slane %v371, 6
    %v895 = vsel %vm806, %v892, %v894
    %v896 = vsel %vm806, %v894, %v672
    %v897 = vrot.slane %v375, 6
    %v898 = vrot.slane %v377, 6
    %v899 = vsel %vm806, %v897, %v898
    %v900 = vrot.slane %v379, 6
    %v901 = vsel %vm806, %v898, %v900
    %v902 = vrot.slane %v381, 6
    %v903 = vsel %vm806, %v900, %v902
    %v904 = vrot.slane %v383, 6
    %v905 = vsel %vm806, %v902, %v904
    %v906 = vrot.slane %v385, 6
    %v907 = vsel %vm806, %v904, %v906
    %v908 = vrot.slane %v387, 6
    %v909 = vsel %vm806, %v906, %v908
    %v910 = vrot.slane %v389, 6
    %v911 = vsel %vm806, %v908, %v910
    %v912 = vrot.slane %v391, 6
    %v913 = vsel %vm806, %v910, %v912
    %v914 = vrot.slane %v393, 6
    %v915 = vsel %vm806, %v912, %v914
    %v916 = vrot.slane %v395, 6
    %v917 = vsel %vm806, %v914, %v916
    %v918 = vrot.slane %v397, 6
    %v919 = vsel %vm806, %v916, %v918
    %v920 = vrot.slane %v399, 6
    %v921 = vsel %vm806, %v918, %v920
    %v922 = vrot.slane %v401, 6
    %v923 = vsel %vm806, %v920, %v922
    %v924 = vrot.slane %v403, 6
    %v925 = vsel %vm806, %v922, %v924
    %v926 = vsel %vm806, %v924, %v673
    %v927 = vrot.slane %v407, 6
    %v928 = vrot.slane %v409, 6
    %v929 = vsel %vm806, %v927, %v928
    %v930 = vrot.slane %v411, 6
    %v931 = vsel %vm806, %v928, %v930
    %v932 = vrot.slane %v413, 6
    %v933 = vsel %vm806, %v930, %v932
    %v934 = vrot.slane %v415, 6
    %v935 = vsel %vm806, %v932, %v934
    %v936 = vrot.slane %v417, 6
    %v937 = vsel %vm806, %v934, %v936
    %v938 = vrot.slane %v419, 6
    %v939 = vsel %vm806, %v936, %v938
    %v940 = vrot.slane %v421, 6
    %v941 = vsel %vm806, %v938, %v940
    %v942 = vrot.slane %v423, 6
    %v943 = vsel %vm806, %v940, %v942
    %v944 = vrot.slane %v425, 6
    %v945 = vsel %vm806, %v942, %v944
    %v946 = vrot.slane %v427, 6
    %v947 = vsel %vm806, %v944, %v946
    %v948 = vrot.slane %v429, 6
    %v949 = vsel %vm806, %v946, %v948
    %v950 = vrot.slane %v431, 6
    %v951 = vsel %vm806, %v948, %v950
    %v952 = vrot.slane %v433, 6
    %v953 = vsel %vm806, %v950, %v952
    %v954 = vrot.slane %v435, 6
    %v955 = vsel %vm806, %v952, %v954
    %v956 = vsel %vm806, %v954, %v674
    %v957 = vrot.slane %v439, 6
    %v958 = vrot.slane %v441, 6
    %v959 = vsel %vm806, %v957, %v958
    %v960 = vrot.slane %v443, 6
    %v961 = vsel %vm806, %v958, %v960
    %v962 = vrot.slane %v445, 6
    %v963 = vsel %vm806, %v960, %v962
    %v964 = vrot.slane %v447, 6
    %v965 = vsel %vm806, %v962, %v964
    %v966 = vrot.slane %v449, 6
    %v967 = vsel %vm806, %v964, %v966
    %v968 = vrot.slane %v451, 6
    %v969 = vsel %vm806, %v966, %v968
    %v970 = vrot.slane %v453, 6
    %v971 = vsel %vm806, %v968, %v970
    %v972 = vrot.slane %v455, 6
    %v973 = vsel %vm806, %v970, %v972
    %v974 = vrot.slane %v457, 6
    %v975 = vsel %vm806, %v972, %v974
    %v976 = vrot.slane %v459, 6
    %v977 = vsel %vm806, %v974, %v976
    %v978 = vrot.slane %v461, 6
    %v979 = vsel %vm806, %v976, %v978
    %v980 = vrot.slane %v463, 6
    %v981 = vsel %vm806, %v978, %v980
    %v982 = vrot.slane %v465, 6
    %v983 = vsel %vm806, %v980, %v982
    %v984 = vrot.slane %v467, 6
    %v985 = vsel %vm806, %v982, %v984
    %v986 = vsel %vm806, %v984, %v675
    %v987 = vrot.slane %v471, 6
    %v988 = vrot.slane %v473, 6
    %v989 = vsel %vm806, %v987, %v988
    %v990 = vrot.slane %v475, 6
    %v991 = vsel %vm806, %v988, %v990
    %v992 = vrot.slane %v477, 6
    %v993 = vsel %vm806, %v990, %v992
    %v994 = vrot.slane %v479, 6
    %v995 = vsel %vm806, %v992, %v994
    %v996 = vrot.slane %v481, 6
    %v997 = vsel %vm806, %v994, %v996
    %v998 = vrot.slane %v483, 6
    %v999 = vsel %vm806, %v996, %v998
    %v1000 = vrot.slane %v485, 6
    %v1001 = vsel %vm806, %v998, %v1000
    %v1002 = vrot.slane %v487, 6
    %v1003 = vsel %vm806, %v1000, %v1002
    %v1004 = vrot.slane %v489, 6
    %v1005 = vsel %vm806, %v1002, %v1004
    %v1006 = vrot.slane %v491, 6
    %v1007 = vsel %vm806, %v1004, %v1006
    %v1008 = vrot.slane %v493, 6
    %v1009 = vsel %vm806, %v1006, %v1008
    %v1010 = vrot.slane %v495, 6
    %v1011 = vsel %vm806, %v1008, %v1010
    %v1012 = vrot.slane %v497, 6
    %v1013 = vsel %vm806, %v1010, %v1012
    %v1014 = vrot.slane %v499, 6
    %v1015 = vsel %vm806, %v1012, %v1014
    %v1016 = vsel %vm806, %v1014, %v676
    %v1017 = vrot.slane %v503, 6
    %v1018 = vrot.slane %v505, 6
    %v1019 = vsel %vm806, %v1017, %v1018
    %v1020 = vrot.slane %v507, 6
    %v1021 = vsel %vm806, %v1018, %v1020
    %v1022 = vrot.slane %v509, 6
    %v1023 = vsel %vm806, %v1020, %v1022
    %v1024 = vrot.slane %v511, 6
    %v1025 = vsel %vm806, %v1022, %v1024
    %v1026 = vrot.slane %v513, 6
    %v1027 = vsel %vm806, %v1024, %v1026
    %v1028 = vrot.slane %v515, 6
    %v1029 = vsel %vm806, %v1026, %v1028
    %v1030 = vrot.slane %v517, 6
    %v1031 = vsel %vm806, %v1028, %v1030
    %v1032 = vrot.slane %v519, 6
    %v1033 = vsel %vm806, %v1030, %v1032
    %v1034 = vrot.slane %v521, 6
    %v1035 = vsel %vm806, %v1032, %v1034
    %v1036 = vrot.slane %v523, 6
    %v1037 = vsel %vm806, %v1034, %v1036
    %v1038 = vrot.slane %v525, 6
    %v1039 = vsel %vm806, %v1036, %v1038
    %v1040 = vrot.slane %v527, 6
    %v1041 = vsel %vm806, %v1038, %v1040
    %v1042 = vrot.slane %v529, 6
    %v1043 = vsel %vm806, %v1040, %v1042
    %v1044 = vrot.slane %v531, 6
    %v1045 = vsel %vm806, %v1042, %v1044
    %v1046 = vsel %vm806, %v1044, %v677
    %v1175 = vsel %vm806, %v670, %v807
    %v1176 = vsel %vm806, %v671, %v837
    %v1177 = vsel %vm806, %v672, %v867
    %v1178 = vsel %vm806, %v673, %v897
    %v1179 = vsel %vm806, %v674, %v927
    %v1180 = vsel %vm806, %v675, %v957
    %v1181 = vsel %vm806, %v676, %v987
    %v1182 = vsel %vm806, %v677, %v1017
    %1183 = vst [vmem:[%s1] sm:$0xff] %v1175
    %vm1184 = vcmask 31744
    %1185 = vst.msk [vmem:[%s1 + $0x8] sm:$0xff] %vm1184, %v1175
    %1186 = vst [vmem:[%s1 + $0x10] sm:$0xff] %v809
    %1187 = vst.msk [vmem:[%s1 + $0x18] sm:$0xff] %vm1184, %v809
    %1188 = vst [vmem:[%s1 + $0x20] sm:$0xff] %v811
    %1189 = vst.msk [vmem:[%s1 + $0x28] sm:$0xff] %vm1184, %v811
    %1190 = vst [vmem:[%s1 + $0x30] sm:$0xff] %v813
    %1191 = vst.msk [vmem:[%s1 + $0x38] sm:$0xff] %vm1184, %v813
    %1192 = vst [vmem:[%s1 + $0x40] sm:$0xff] %v815
    %1193 = vst.msk [vmem:[%s1 + $0x48] sm:$0xff] %vm1184, %v815
    %1194 = vst [vmem:[%s1 + $0x50] sm:$0xff] %v817
    %1195 = vst.msk [vmem:[%s1 + $0x58] sm:$0xff] %vm1184, %v817
    %1196 = vst [vmem:[%s1 + $0x60] sm:$0xff] %v819
    %1197 = vst.msk [vmem:[%s1 + $0x68] sm:$0xff] %vm1184, %v819
    %1198 = vst [vmem:[%s1 + $0x70] sm:$0xff] %v821
    %1199 = vst.msk [vmem:[%s1 + $0x78] sm:$0xff] %vm1184, %v821
    %1200 = vst [vmem:[%s1 + $0x80] sm:$0xff] %v823
    %1201 = vst.msk [vmem:[%s1 + $0x88] sm:$0xff] %vm1184, %v823
    %1202 = vst [vmem:[%s1 + $0x90] sm:$0xff] %v825
    %1203 = vst.msk [vmem:[%s1 + $0x98] sm:$0xff] %vm1184, %v825
    %1204 = vst [vmem:[%s1 + $0xa0] sm:$0xff] %v827
    %1205 = vst.msk [vmem:[%s1 + $0xa8] sm:$0xff] %vm1184, %v827
    %1206 = vst [vmem:[%s1 + $0xb0] sm:$0xff] %v829
    %1207 = vst.msk [vmem:[%s1 + $0xb8] sm:$0xff] %vm1184, %v829
    %1208 = vst [vmem:[%s1 + $0xc0] sm:$0xff] %v831
    %1209 = vst.msk [vmem:[%s1 + $0xc8] sm:$0xff] %vm1184, %v831
    %1210 = vst [vmem:[%s1 + $0xd0] sm:$0xff] %v833
    %1211 = vst.msk [vmem:[%s1 + $0xd8] sm:$0xff] %vm1184, %v833
    %1212 = vst [vmem:[%s1 + $0xe0] sm:$0xff] %v835
    %1213 = vst.msk [vmem:[%s1 + $0xe8] sm:$0xff] %vm1184, %v835
    %1214 = vst [vmem:[%s1 + $0xf0] sm:$0xff] %v836
    %1215 = vst.msk [vmem:[%s1 + $0xf8] sm:$0xff] %vm1184, %v836
    %1216 = vst [vmem:[%s1 + $0x100] sm:$0xf] %v1175
    %vm1217 = vcmask 27648
    %1218 = vst.msk [vmem:[%s1 + $0x108] sm:$0xf] %vm1217, %v1175
    %1219 = vst [vmem:[%s1 + $0x110] sm:$0xff] %v1176
    %1220 = vst.msk [vmem:[%s1 + $0x118] sm:$0xff] %vm1184, %v1176
    %1221 = vst [vmem:[%s1 + $0x120] sm:$0xff] %v839
    %1222 = vst.msk [vmem:[%s1 + $0x128] sm:$0xff] %vm1184, %v839
    %1223 = vst [vmem:[%s1 + $0x130] sm:$0xff] %v841
    %1224 = vst.msk [vmem:[%s1 + $0x138] sm:$0xff] %vm1184, %v841
    %1225 = vst [vmem:[%s1 + $0x140] sm:$0xff] %v843
    %1226 = vst.msk [vmem:[%s1 + $0x148] sm:$0xff] %vm1184, %v843
    %1227 = vst [vmem:[%s1 + $0x150] sm:$0xff] %v845
    %1228 = vst.msk [vmem:[%s1 + $0x158] sm:$0xff] %vm1184, %v845
    %1229 = vst [vmem:[%s1 + $0x160] sm:$0xff] %v847
    %1230 = vst.msk [vmem:[%s1 + $0x168] sm:$0xff] %vm1184, %v847
    %1231 = vst [vmem:[%s1 + $0x170] sm:$0xff] %v849
    %1232 = vst.msk [vmem:[%s1 + $0x178] sm:$0xff] %vm1184, %v849
    %1233 = vst [vmem:[%s1 + $0x180] sm:$0xff] %v851
    %1234 = vst.msk [vmem:[%s1 + $0x188] sm:$0xff] %vm1184, %v851
    %1235 = vst [vmem:[%s1 + $0x190] sm:$0xff] %v853
    %1236 = vst.msk [vmem:[%s1 + $0x198] sm:$0xff] %vm1184, %v853
    %1237 = vst [vmem:[%s1 + $0x1a0] sm:$0xff] %v855
    %1238 = vst.msk [vmem:[%s1 + $0x1a8] sm:$0xff] %vm1184, %v855
    %1239 = vst [vmem:[%s1 + $0x1b0] sm:$0xff] %v857
    %1240 = vst.msk [vmem:[%s1 + $0x1b8] sm:$0xff] %vm1184, %v857
    %1241 = vst [vmem:[%s1 + $0x1c0] sm:$0xff] %v859
    %1242 = vst.msk [vmem:[%s1 + $0x1c8] sm:$0xff] %vm1184, %v859
    %1243 = vst [vmem:[%s1 + $0x1d0] sm:$0xff] %v861
    %1244 = vst.msk [vmem:[%s1 + $0x1d8] sm:$0xff] %vm1184, %v861
    %1245 = vst [vmem:[%s1 + $0x1e0] sm:$0xff] %v863
    %1246 = vst.msk [vmem:[%s1 + $0x1e8] sm:$0xff] %vm1184, %v863
    %1247 = vst [vmem:[%s1 + $0x1f0] sm:$0xff] %v865
    %1248 = vst.msk [vmem:[%s1 + $0x1f8] sm:$0xff] %vm1184, %v865
    %1249 = vst [vmem:[%s1 + $0x200] sm:$0xff] %v866
    %1250 = vst.msk [vmem:[%s1 + $0x208] sm:$0xff] %vm1184, %v866
    %1251 = vst [vmem:[%s1 + $0x210] sm:$0xf] %v1176
    %1252 = vst.msk [vmem:[%s1 + $0x218] sm:$0xf] %vm1217, %v1176
    %1253 = vst [vmem:[%s1 + $0x220] sm:$0xff] %v1177
    %1254 = vst.msk [vmem:[%s1 + $0x228] sm:$0xff] %vm1184, %v1177
    %1255 = vst [vmem:[%s1 + $0x230] sm:$0xff] %v869
    %1256 = vst.msk [vmem:[%s1 + $0x238] sm:$0xff] %vm1184, %v869
    %1257 = vst [vmem:[%s1 + $0x240] sm:$0xff] %v871
    %1258 = vst.msk [vmem:[%s1 + $0x248] sm:$0xff] %vm1184, %v871
    %1259 = vst [vmem:[%s1 + $0x250] sm:$0xff] %v873
    %1260 = vst.msk [vmem:[%s1 + $0x258] sm:$0xff] %vm1184, %v873
    %1261 = vst [vmem:[%s1 + $0x260] sm:$0xff] %v875
    %1262 = vst.msk [vmem:[%s1 + $0x268] sm:$0xff] %vm1184, %v875
    %1263 = vst [vmem:[%s1 + $0x270] sm:$0xff] %v877
    %1264 = vst.msk [vmem:[%s1 + $0x278] sm:$0xff] %vm1184, %v877
    %1265 = vst [vmem:[%s1 + $0x280] sm:$0xff] %v879
    %1266 = vst.msk [vmem:[%s1 + $0x288] sm:$0xff] %vm1184, %v879
    %1267 = vst [vmem:[%s1 + $0x290] sm:$0xff] %v881
    %1268 = vst.msk [vmem:[%s1 + $0x298] sm:$0xff] %vm1184, %v881
    %1269 = vst [vmem:[%s1 + $0x2a0] sm:$0xff] %v883
    %1270 = vst.msk [vmem:[%s1 + $0x2a8] sm:$0xff] %vm1184, %v883
    %1271 = vst [vmem:[%s1 + $0x2b0] sm:$0xff] %v885
    %1272 = vst.msk [vmem:[%s1 + $0x2b8] sm:$0xff] %vm1184, %v885
    %1273 = vst [vmem:[%s1 + $0x2c0] sm:$0xff] %v887
    %1274 = vst.msk [vmem:[%s1 + $0x2c8] sm:$0xff] %vm1184, %v887
    %1275 = vst [vmem:[%s1 + $0x2d0] sm:$0xff] %v889
    %1276 = vst.msk [vmem:[%s1 + $0x2d8] sm:$0xff] %vm1184, %v889
    %1277 = vst [vmem:[%s1 + $0x2e0] sm:$0xff] %v891
    %1278 = vst.msk [vmem:[%s1 + $0x2e8] sm:$0xff] %vm1184, %v891
    %1279 = vst [vmem:[%s1 + $0x2f0] sm:$0xff] %v893
    %1280 = vst.msk [vmem:[%s1 + $0x2f8] sm:$0xff] %vm1184, %v893
    %1281 = vst [vmem:[%s1 + $0x300] sm:$0xff] %v895
    %1282 = vst.msk [vmem:[%s1 + $0x308] sm:$0xff] %vm1184, %v895
    %1283 = vst [vmem:[%s1 + $0x310] sm:$0xff] %v896
    %1284 = vst.msk [vmem:[%s1 + $0x318] sm:$0xff] %vm1184, %v896
    %1285 = vst [vmem:[%s1 + $0x320] sm:$0xf] %v1177
    %1286 = vst.msk [vmem:[%s1 + $0x328] sm:$0xf] %vm1217, %v1177
    %1287 = vst [vmem:[%s1 + $0x330] sm:$0xff] %v1178
    %1288 = vst.msk [vmem:[%s1 + $0x338] sm:$0xff] %vm1184, %v1178
    %1289 = vst [vmem:[%s1 + $0x340] sm:$0xff] %v899
    %1290 = vst.msk [vmem:[%s1 + $0x348] sm:$0xff] %vm1184, %v899
    %1291 = vst [vmem:[%s1 + $0x350] sm:$0xff] %v901
    %1292 = vst.msk [vmem:[%s1 + $0x358] sm:$0xff] %vm1184, %v901
    %1293 = vst [vmem:[%s1 + $0x360] sm:$0xff] %v903
    %1294 = vst.msk [vmem:[%s1 + $0x368] sm:$0xff] %vm1184, %v903
    %1295 = vst [vmem:[%s1 + $0x370] sm:$0xff] %v905
    %1296 = vst.msk [vmem:[%s1 + $0x378] sm:$0xff] %vm1184, %v905
    %1297 = vst [vmem:[%s1 + $0x380] sm:$0xff] %v907
    %1298 = vst.msk [vmem:[%s1 + $0x388] sm:$0xff] %vm1184, %v907
    %1299 = vst [vmem:[%s1 + $0x390] sm:$0xff] %v909
    %1300 = vst.msk [vmem:[%s1 + $0x398] sm:$0xff] %vm1184, %v909
    %1301 = vst [vmem:[%s1 + $0x3a0] sm:$0xff] %v911
    %1302 = vst.msk [vmem:[%s1 + $0x3a8] sm:$0xff] %vm1184, %v911
    %1303 = vst [vmem:[%s1 + $0x3b0] sm:$0xff] %v913
    %1304 = vst.msk [vmem:[%s1 + $0x3b8] sm:$0xff] %vm1184, %v913
    %1305 = vst [vmem:[%s1 + $0x3c0] sm:$0xff] %v915
    %1306 = vst.msk [vmem:[%s1 + $0x3c8] sm:$0xff] %vm1184, %v915
    %1307 = vst [vmem:[%s1 + $0x3d0] sm:$0xff] %v917
    %1308 = vst.msk [vmem:[%s1 + $0x3d8] sm:$0xff] %vm1184, %v917
    %1309 = vst [vmem:[%s1 + $0x3e0] sm:$0xff] %v919
    %1310 = vst.msk [vmem:[%s1 + $0x3e8] sm:$0xff] %vm1184, %v919
    %1311 = vst [vmem:[%s1 + $0x3f0] sm:$0xff] %v921
    %1312 = vst.msk [vmem:[%s1 + $0x3f8] sm:$0xff] %vm1184, %v921
    %1313 = vst [vmem:[%s1 + $0x400] sm:$0xff] %v923
    %1314 = vst.msk [vmem:[%s1 + $0x408] sm:$0xff] %vm1184, %v923
    %1315 = vst [vmem:[%s1 + $0x410] sm:$0xff] %v925
    %1316 = vst.msk [vmem:[%s1 + $0x418] sm:$0xff] %vm1184, %v925
    %1317 = vst [vmem:[%s1 + $0x420] sm:$0xff] %v926
    %1318 = vst.msk [vmem:[%s1 + $0x428] sm:$0xff] %vm1184, %v926
    %1319 = vst [vmem:[%s1 + $0x430] sm:$0xf] %v1178
    %1320 = vst.msk [vmem:[%s1 + $0x438] sm:$0xf] %vm1217, %v1178
    %1321 = vst [vmem:[%s1 + $0x440] sm:$0xff] %v1179
    %1322 = vst.msk [vmem:[%s1 + $0x448] sm:$0xff] %vm1184, %v1179
    %1323 = vst [vmem:[%s1 + $0x450] sm:$0xff] %v929
    %1324 = vst.msk [vmem:[%s1 + $0x458] sm:$0xff] %vm1184, %v929
    %1325 = vst [vmem:[%s1 + $0x460] sm:$0xff] %v931
    %1326 = vst.msk [vmem:[%s1 + $0x468] sm:$0xff] %vm1184, %v931
    %1327 = vst [vmem:[%s1 + $0x470] sm:$0xff] %v933
    %1328 = vst.msk [vmem:[%s1 + $0x478] sm:$0xff] %vm1184, %v933
    %1329 = vst [vmem:[%s1 + $0x480] sm:$0xff] %v935
    %1330 = vst.msk [vmem:[%s1 + $0x488] sm:$0xff] %vm1184, %v935
    %1331 = vst [vmem:[%s1 + $0x490] sm:$0xff] %v937
    %1332 = vst.msk [vmem:[%s1 + $0x498] sm:$0xff] %vm1184, %v937
    %1333 = vst [vmem:[%s1 + $0x4a0] sm:$0xff] %v939
    %1334 = vst.msk [vmem:[%s1 + $0x4a8] sm:$0xff] %vm1184, %v939
    %1335 = vst [vmem:[%s1 + $0x4b0] sm:$0xff] %v941
    %1336 = vst.msk [vmem:[%s1 + $0x4b8] sm:$0xff] %vm1184, %v941
    %1337 = vst [vmem:[%s1 + $0x4c0] sm:$0xff] %v943
    %1338 = vst.msk [vmem:[%s1 + $0x4c8] sm:$0xff] %vm1184, %v943
    %1339 = vst [vmem:[%s1 + $0x4d0] sm:$0xff] %v945
    %1340 = vst.msk [vmem:[%s1 + $0x4d8] sm:$0xff] %vm1184, %v945
    %1341 = vst [vmem:[%s1 + $0x4e0] sm:$0xff] %v947
    %1342 = vst.msk [vmem:[%s1 + $0x4e8] sm:$0xff] %vm1184, %v947
    %1343 = vst [vmem:[%s1 + $0x4f0] sm:$0xff] %v949
    %1344 = vst.msk [vmem:[%s1 + $0x4f8] sm:$0xff] %vm1184, %v949
    %1345 = vst [vmem:[%s1 + $0x500] sm:$0xff] %v951
    %1346 = vst.msk [vmem:[%s1 + $0x508] sm:$0xff] %vm1184, %v951
    %1347 = vst [vmem:[%s1 + $0x510] sm:$0xff] %v953
    %1348 = vst.msk [vmem:[%s1 + $0x518] sm:$0xff] %vm1184, %v953
    %1349 = vst [vmem:[%s1 + $0x520] sm:$0xff] %v955
    %1350 = vst.msk [vmem:[%s1 + $0x528] sm:$0xff] %vm1184, %v955
    %1351 = vst [vmem:[%s1 + $0x530] sm:$0xff] %v956
    %1352 = vst.msk [vmem:[%s1 + $0x538] sm:$0xff] %vm1184, %v956
    %1353 = vst [vmem:[%s1 + $0x540] sm:$0xf] %v1179
    %1354 = vst.msk [vmem:[%s1 + $0x548] sm:$0xf] %vm1217, %v1179
    %1355 = vst [vmem:[%s1 + $0x550] sm:$0xff] %v1180
    %1356 = vst.msk [vmem:[%s1 + $0x558] sm:$0xff] %vm1184, %v1180
    %1357 = vst [vmem:[%s1 + $0x560] sm:$0xff] %v959
    %1358 = vst.msk [vmem:[%s1 + $0x568] sm:$0xff] %vm1184, %v959
    %1359 = vst [vmem:[%s1 + $0x570] sm:$0xff] %v961
    %1360 = vst.msk [vmem:[%s1 + $0x578] sm:$0xff] %vm1184, %v961
    %1361 = vst [vmem:[%s1 + $0x580] sm:$0xff] %v963
    %1362 = vst.msk [vmem:[%s1 + $0x588] sm:$0xff] %vm1184, %v963
    %1363 = vst [vmem:[%s1 + $0x590] sm:$0xff] %v965
    %1364 = vst.msk [vmem:[%s1 + $0x598] sm:$0xff] %vm1184, %v965
    %1365 = vst [vmem:[%s1 + $0x5a0] sm:$0xff] %v967
    %1366 = vst.msk [vmem:[%s1 + $0x5a8] sm:$0xff] %vm1184, %v967
    %1367 = vst [vmem:[%s1 + $0x5b0] sm:$0xff] %v969
    %1368 = vst.msk [vmem:[%s1 + $0x5b8] sm:$0xff] %vm1184, %v969
    %1369 = vst [vmem:[%s1 + $0x5c0] sm:$0xff] %v971
    %1370 = vst.msk [vmem:[%s1 + $0x5c8] sm:$0xff] %vm1184, %v971
    %1371 = vst [vmem:[%s1 + $0x5d0] sm:$0xff] %v973
    %1372 = vst.msk [vmem:[%s1 + $0x5d8] sm:$0xff] %vm1184, %v973
    %1373 = vst [vmem:[%s1 + $0x5e0] sm:$0xff] %v975
    %1374 = vst.msk [vmem:[%s1 + $0x5e8] sm:$0xff] %vm1184, %v975
    %1375 = vst [vmem:[%s1 + $0x5f0] sm:$0xff] %v977
    %1376 = vst.msk [vmem:[%s1 + $0x5f8] sm:$0xff] %vm1184, %v977
    %1377 = vst [vmem:[%s1 + $0x600] sm:$0xff] %v979
    %1378 = vst.msk [vmem:[%s1 + $0x608] sm:$0xff] %vm1184, %v979
    %1379 = vst [vmem:[%s1 + $0x610] sm:$0xff] %v981
    %1380 = vst.msk [vmem:[%s1 + $0x618] sm:$0xff] %vm1184, %v981
    %1381 = vst [vmem:[%s1 + $0x620] sm:$0xff] %v983
    %1382 = vst.msk [vmem:[%s1 + $0x628] sm:$0xff] %vm1184, %v983
    %1383 = vst [vmem:[%s1 + $0x630] sm:$0xff] %v985
    %1384 = vst.msk [vmem:[%s1 + $0x638] sm:$0xff] %vm1184, %v985
    %1385 = vst [vmem:[%s1 + $0x640] sm:$0xff] %v986
    %1386 = vst.msk [vmem:[%s1 + $0x648] sm:$0xff] %vm1184, %v986
    %1387 = vst [vmem:[%s1 + $0x650] sm:$0xf] %v1180
    %1388 = vst.msk [vmem:[%s1 + $0x658] sm:$0xf] %vm1217, %v1180
    %1389 = vst [vmem:[%s1 + $0x660] sm:$0xff] %v1181
    %1390 = vst.msk [vmem:[%s1 + $0x668] sm:$0xff] %vm1184, %v1181
    %1391 = vst [vmem:[%s1 + $0x670] sm:$0xff] %v989
    %1392 = vst.msk [vmem:[%s1 + $0x678] sm:$0xff] %vm1184, %v989
    %1393 = vst [vmem:[%s1 + $0x680] sm:$0xff] %v991
    %1394 = vst.msk [vmem:[%s1 + $0x688] sm:$0xff] %vm1184, %v991
    %1395 = vst [vmem:[%s1 + $0x690] sm:$0xff] %v993
    %1396 = vst.msk [vmem:[%s1 + $0x698] sm:$0xff] %vm1184, %v993
    %1397 = vst [vmem:[%s1 + $0x6a0] sm:$0xff] %v995
    %1398 = vst.msk [vmem:[%s1 + $0x6a8] sm:$0xff] %vm1184, %v995
    %1399 = vst [vmem:[%s1 + $0x6b0] sm:$0xff] %v997
    %1400 = vst.msk [vmem:[%s1 + $0x6b8] sm:$0xff] %vm1184, %v997
    %1401 = vst [vmem:[%s1 + $0x6c0] sm:$0xff] %v999
    %1402 = vst.msk [vmem:[%s1 + $0x6c8] sm:$0xff] %vm1184, %v999
    %1403 = vst [vmem:[%s1 + $0x6d0] sm:$0xff] %v1001
    %1404 = vst.msk [vmem:[%s1 + $0x6d8] sm:$0xff] %vm1184, %v1001
    %1405 = vst [vmem:[%s1 + $0x6e0] sm:$0xff] %v1003
    %1406 = vst.msk [vmem:[%s1 + $0x6e8] sm:$0xff] %vm1184, %v1003
    %1407 = vst [vmem:[%s1 + $0x6f0] sm:$0xff] %v1005
    %1408 = vst.msk [vmem:[%s1 + $0x6f8] sm:$0xff] %vm1184, %v1005
    %1409 = vst [vmem:[%s1 + $0x700] sm:$0xff] %v1007
    %1410 = vst.msk [vmem:[%s1 + $0x708] sm:$0xff] %vm1184, %v1007
    %1411 = vst [vmem:[%s1 + $0x710] sm:$0xff] %v1009
    %1412 = vst.msk [vmem:[%s1 + $0x718] sm:$0xff] %vm1184, %v1009
    %1413 = vst [vmem:[%s1 + $0x720] sm:$0xff] %v1011
    %1414 = vst.msk [vmem:[%s1 + $0x728] sm:$0xff] %vm1184, %v1011
    %1415 = vst [vmem:[%s1 + $0x730] sm:$0xff] %v1013
    %1416 = vst.msk [vmem:[%s1 + $0x738] sm:$0xff] %vm1184, %v1013
    %1417 = vst [vmem:[%s1 + $0x740] sm:$0xff] %v1015
    %1418 = vst.msk [vmem:[%s1 + $0x748] sm:$0xff] %vm1184, %v1015
    %1419 = vst [vmem:[%s1 + $0x750] sm:$0xff] %v1016
    %1420 = vst.msk [vmem:[%s1 + $0x758] sm:$0xff] %vm1184, %v1016
    %1421 = vst [vmem:[%s1 + $0x760] sm:$0xf] %v1181
    %1422 = vst.msk [vmem:[%s1 + $0x768] sm:$0xf] %vm1217, %v1181
    %1423 = vst [vmem:[%s1 + $0x770] sm:$0xff] %v1182
    %1424 = vst.msk [vmem:[%s1 + $0x778] sm:$0xff] %vm1184, %v1182
    %1425 = vst [vmem:[%s1 + $0x780] sm:$0xff] %v1019
    %1426 = vst.msk [vmem:[%s1 + $0x788] sm:$0xff] %vm1184, %v1019
    %1427 = vst [vmem:[%s1 + $0x790] sm:$0xff] %v1021
    %1428 = vst.msk [vmem:[%s1 + $0x798] sm:$0xff] %vm1184, %v1021
    %1429 = vst [vmem:[%s1 + $0x7a0] sm:$0xff] %v1023
    %1430 = vst.msk [vmem:[%s1 + $0x7a8] sm:$0xff] %vm1184, %v1023
    %1431 = vst [vmem:[%s1 + $0x7b0] sm:$0xff] %v1025
    %1432 = vst.msk [vmem:[%s1 + $0x7b8] sm:$0xff] %vm1184, %v1025
    %1433 = vst [vmem:[%s1 + $0x7c0] sm:$0xff] %v1027
    %1434 = vst.msk [vmem:[%s1 + $0x7c8] sm:$0xff] %vm1184, %v1027
    %1435 = vst [vmem:[%s1 + $0x7d0] sm:$0xff] %v1029
    %1436 = vst.msk [vmem:[%s1 + $0x7d8] sm:$0xff] %vm1184, %v1029
    %1437 = vst [vmem:[%s1 + $0x7e0] sm:$0xff] %v1031
    %1438 = vst.msk [vmem:[%s1 + $0x7e8] sm:$0xff] %vm1184, %v1031
    %1439 = vst [vmem:[%s1 + $0x7f0] sm:$0xff] %v1033
    %1440 = vst.msk [vmem:[%s1 + $0x7f8] sm:$0xff] %vm1184, %v1033
    %1441 = vst [vmem:[%s1 + $0x800] sm:$0xff] %v1035
    %1442 = vst.msk [vmem:[%s1 + $0x808] sm:$0xff] %vm1184, %v1035
    %1443 = vst [vmem:[%s1 + $0x810] sm:$0xff] %v1037
    %1444 = vst.msk [vmem:[%s1 + $0x818] sm:$0xff] %vm1184, %v1037
    %1445 = vst [vmem:[%s1 + $0x820] sm:$0xff] %v1039
    %1446 = vst.msk [vmem:[%s1 + $0x828] sm:$0xff] %vm1184, %v1039
    %1447 = vst [vmem:[%s1 + $0x830] sm:$0xff] %v1041
    %1448 = vst.msk [vmem:[%s1 + $0x838] sm:$0xff] %vm1184, %v1041
    %1449 = vst [vmem:[%s1 + $0x840] sm:$0xff] %v1043
    %1450 = vst.msk [vmem:[%s1 + $0x848] sm:$0xff] %vm1184, %v1043
    %1451 = vst [vmem:[%s1 + $0x850] sm:$0xff] %v1045
    %1452 = vst.msk [vmem:[%s1 + $0x858] sm:$0xff] %vm1184, %v1045
    %1453 = vst [vmem:[%s1 + $0x860] sm:$0xff] %v1046
    %1454 = vst.msk [vmem:[%s1 + $0x868] sm:$0xff] %vm1184, %v1046
    %1455 = vst [vmem:[%s1 + $0x870] sm:$0xf] %v1182
    %1456 = vst.msk [vmem:[%s1 + $0x878] sm:$0xf] %vm1217, %v1182
    // Predicated region
    $region10: #{tpu_custom_call.1} parent=1 // pred_check
      _
    $region11: #{tpu_custom_call.1} parent=1 // pred_check_branch
      %1458 = sbr.rel (0) target = $region13
    $region12: #{tpu_custom_call.1} parent=1 // pred_region
      _
    $region13: #{tpu_custom_call.1} parent=1 // pred_fallthru
      _
    // Predicated region
    $region14: #{tpu_custom_call.1} parent=1 // pred_check
      _
    $region15: #{tpu_custom_call.1} parent=1 // pred_check_branch
      %1460 = sbr.rel (0) target = $region17
    $region16: #{tpu_custom_call.1} parent=1 // pred_region
      _
    $region17: #{tpu_custom_call.1} parent=1 // pred_fallthru
      _
    %1461 = vsyncpa [#allocation3], 1

</llo_original>
